<compile_context>
chip_gen: v5e
topology: v5e:2x2
jax: 0.10.0
libtpu: 0.0.40
codegen_flags: <defaults>
</compile_context>

<pallas_src>
import functools

import numpy as np
import jax
import jax.numpy as jnp
from jax.experimental import pallas as pl
from jax.experimental.pallas import tpu as pltpu

NEG_INF = float("-inf")  # aggregation identity of the max-plus semifield


def _parabolic_taps(scale, kernel_size):
    """h[n] = -z_n^2 / (4*scale), z_n = linspace(-ks//2+1, ks//2, ks) (torch conv.)."""
    lo = (-kernel_size) // 2 + 1
    hi = kernel_size // 2
    z = jnp.asarray(np.linspace(lo, hi, kernel_size, dtype=np.float32))
    s = scale.astype(jnp.float32).reshape(())
    return (-(z * z) / (4.0 * s)).astype(jnp.float32)          # (ks,) f32


def _semipool_kernel(h_ref, x_ref, o_ref, *, ks, w_d):
    """Max-plus sliding window along the lane (W) axis.

    h_ref : (ks,) f32 in SMEM   (parabolic tap weights, already scaled)
    x_ref : (TR, Wp) f32 VMEM tile of input rows (Wp = W + pad_w)
    o_ref : (TR, Wd) f32 VMEM tile of dense (stride-1 along W) outputs
    """
    xv = x_ref[...]                                   # single VMEM load
    # Tap 0 initializes the accumulator (always in-bounds); remaining taps are
    # weighting (+) then aggregation (max). Static unroll over ks taps keeps
    # the lane shifts visible to the LLO scheduler.
    acc = xv[:, 0:w_d] + h_ref[0]
    for n in range(1, ks):
        acc = jnp.maximum(acc, xv[:, n:n + w_d] + h_ref[n])
    o_ref[...] = acc


def _pick_row_tile(n_rows, w_in, w_out, vmem_budget_bytes=12 * 1024 * 1024):
    """Largest row tile whose double-buffered in+out f32 footprint fits budget.

    Budget is conservative enough for v5e/v6e/v7x scoped VMEM; also keeps the
    grid at >= 2 blocks (when there is enough work) so the 'parallel' axis can
    use both TensorCores on v7x.
    """
    bytes_per_row = 4 * (w_in + w_out)                # f32 input + output row
    tr = vmem_budget_bytes // (2 * bytes_per_row)     # 2x for double buffering
    tr = min(int(tr), 1024)
    if n_rows > 16:
        half_rows = (n_rows + 1) // 2
        tr = min(tr, ((half_rows + 7) // 8) * 8)      # >= 2 grid blocks
    tr = min(tr, ((n_rows + 7) // 8) * 8)             # don't exceed row count
    tr = max(8, (tr // 8) * 8)                        # sublane multiple
    return tr


def semi_pool_1d_parabolic(x, scale, *, kernel_size, stride,
                           padding="valid", ceil_mode=False, row_tile=None):
    """Forward pass of SemiPool1dParabolic (max-plus semifield), NCHW input."""
    if padding not in ("valid", "same"):
        raise ValueError('Padding must be either "valid" or "same"')
    B, C, H, W = x.shape
    M, N = 1, kernel_size
    s = stride

    if padding == "valid":
        H_out = (H - M + (s - 1 if ceil_mode else 0)) // s + 1
        W_out = (W - N + (s - 1 if ceil_mode else 0)) // s + 1
    else:  # same
        H_out = -(H // -s)
        W_out = -(W // -s)
    if H_out <= 0 or W_out <= 0:
        raise ValueError("Non-positive output size; input smaller than kernel "
                         "with padding='valid'.")

    pad_h = max((H_out - 1) * s + M - H, 0)
    pad_w = max((W_out - 1) * s + N - W, 0)
    p_l = pad_w // 2
    p_t = pad_h // 2

    x = x.astype(jnp.float32)

    # ---- H axis: the window along H has size 1, so H is only subsampled. ----
    if pad_h > 0:  # only reachable for ceil_mode / 'same' edge cases
        x = jnp.pad(x, ((0, 0), (0, 0), (p_t, pad_h - p_t), (0, 0)),
                    constant_values=NEG_INF)
    if s > 1:
        # NOTE(perf): one strided-gather glue pass, only paid when stride > 1.
        x = x[:, :, ::s, :]
    x = x[:, :, :H_out, :]

    # ---- W axis halo (only when 'same'/ceil actually pads). -----------------
    if pad_w > 0:
        # NOTE(perf): wrapper -inf halo kept (vs. in-kernel roll+mask) for
        # lowering robustness; the s=1 'valid' hot path never takes this.
        x = jnp.pad(x, ((0, 0), (0, 0), (0, 0), (p_l, pad_w - p_l)),
                    constant_values=NEG_INF)

    Wp = W + pad_w
    Wd = Wp - kernel_size + 1          # dense (stride-1 along W) output width
    R = B * C * H_out
    x2 = x.reshape(R, Wp)              # contiguous flatten: metadata only

    taps = _parabolic_taps(scale, kernel_size)         # (ks,) f32 -> SMEM

    TR = row_tile if row_tile is not None else _pick_row_tile(R, Wp, Wd)
    grid = (pl.cdiv(R, TR),)           # non-divisible tail block is allowed:
                                       # tail rows are row-independent garbage
                                       # and never appear in the (R, Wd) output.

    dense = pl.pallas_call(
        functools.partial(_semipool_kernel, ks=kernel_size, w_d=Wd),
        out_shape=jax.ShapeDtypeStruct((R, Wd), jnp.float32),
        grid=grid,
        in_specs=[
            pl.BlockSpec(memory_space=pltpu.MemorySpace.SMEM),   # taps (ks,)
            pl.BlockSpec((TR, Wp), lambda i: (i, 0)),            # input rows
        ],
        out_specs=pl.BlockSpec((TR, Wd), lambda i: (i, 0)),
        compiler_params=pltpu.CompilerParams(
            dimension_semantics=("parallel",),
            vmem_limit_bytes=48 * 1024 * 1024,
        ),
    )(taps, x2)

    out = dense.reshape(B, C, H_out, Wd)
    if s > 1:
        # NOTE(perf): W-stride extraction for s>1 left in the wrapper (strided
        # lane slicing inside the kernel is not a safe Mosaic lowering path).
        out = out[:, :, :, ::s]
    out = out[:, :, :, :W_out]         # no-op when s == 1 (Wd == W_out)
    return out


def ref_forward_np(x, scale, ks, s, padding, ceil_mode):
    """Pure-numpy transliteration of the PyTorch forward (max-plus semifield)."""
    B, C, H, W = x.shape
    lo = (-ks) // 2 + 1
    hi = ks // 2
    z = np.linspace(lo, hi, ks, dtype=np.float32)
    h = -(z * z) / (4.0 * scale)
    if padding == "valid":
        H_out = (H - 1 + (s - 1 if ceil_mode else 0)) // s + 1
        W_out = (W - ks + (s - 1 if ceil_mode else 0)) // s + 1
    else:
        H_out = -(H // -s)
        W_out = -(W // -s)
    pad_h = max((H_out - 1) * s + 1 - H, 0)
    pad_w = max((W_out - 1) * s + ks - W, 0)
    p_l, p_t = pad_w // 2, pad_h // 2
    xp = np.full((B, C, H + pad_h, W + pad_w), -np.inf, np.float32)
    xp[:, :, p_t:p_t + H, p_l:p_l + W] = x
    out = np.full((B, C, H_out, W_out), -np.inf, np.float32)
    for i in range(H_out):
        for j in range(W_out):
            for n in range(ks):
                out[:, :, i, j] = np.maximum(out[:, :, i, j],
                                             xp[:, :, i * s, j * s + n] + h[n])
    return out


if __name__ == "__main__":
    key = jax.random.PRNGKey(0)
    B, C_in, H, W = 2, 4, 16, 16        # c_out == c_in (required by module's view)
    ks = 5
    initial_scale = 1.0                 # nn.Parameter init in __init__

    x = jax.random.normal(key, (B, C_in, H, W), dtype=jnp.float32)
    scale = jnp.full((1,), initial_scale, dtype=jnp.float32)

    # Primary config: padding='valid', stride=1 (fully fused hot path).
    out = semi_pool_1d_parabolic(x, scale, kernel_size=ks, stride=1,
                                 padding="valid", ceil_mode=False)
    out = jax.block_until_ready(out)
    ref = ref_forward_np(np.asarray(x), initial_scale, ks, 1, "valid", False)
    assert out.shape == ref.shape, (out.shape, ref.shape)
    np.testing.assert_allclose(np.asarray(out), ref, rtol=1e-5, atol=1e-5)

    # Secondary config: padding='same', stride=2 (exercises halo + strides;
    # same kernel, only the wrapper plumbing differs).
    out2 = semi_pool_1d_parabolic(x, scale, kernel_size=ks, stride=2,
                                  padding="same", ceil_mode=False)
    out2 = jax.block_until_ready(out2)
    ref2 = ref_forward_np(np.asarray(x), initial_scale, ks, 2, "same", False)
    assert out2.shape == ref2.shape, (out2.shape, ref2.shape)
    np.testing.assert_allclose(np.asarray(out2), ref2, rtol=1e-5, atol=1e-5)

    print("KERNEL_OK")
</pallas_src>

<mosaic_0001>
module attributes {stable_mosaic.version = 11 : i64} {
  func.func @_semipool_kernel(%arg0: i32, %arg1: memref<5xf32, #tpu.memory_space<smem>>, %arg2: memref<64x16xf32, #tpu.memory_space<vmem>>, %arg3: memref<64x12xf32, #tpu.memory_space<vmem>>) attributes {dimension_semantics = [#tpu.dimension_semantics<parallel>], iteration_bounds = array<i64: 2>, scalar_prefetch = 0 : i64, scratch_operands = 0 : i64, tpu.core_type = #tpu.core_type<tc>, window_params = [{transform_indices = @transform_0, window_bounds = array<i64: 5>}, {transform_indices = @transform_1, window_bounds = array<i64: 64, 16>}, {transform_indices = @transform_2, window_bounds = array<i64: 64, 12>}]} {
    %c0 = arith.constant 0 : index
    %c0_0 = arith.constant 0 : index
    %0 = vector.load %arg2[%c0, %c0_0] : memref<64x16xf32, #tpu.memory_space<vmem>>, vector<64x16xf32>
    %1 = vector.extract_strided_slice %0 {offsets = [0, 0], sizes = [64, 12], strides = [1, 1]} : vector<64x16xf32> to vector<64x12xf32>
    %c0_1 = arith.constant 0 : index
    %2 = memref.load %arg1[%c0_1] : memref<5xf32, #tpu.memory_space<smem>>
    %3 = vector.broadcast %2 : f32 to vector<64x12xf32>
    %4 = arith.addf %1, %3 : vector<64x12xf32>
    %5 = vector.extract_strided_slice %0 {offsets = [0, 1], sizes = [64, 12], strides = [1, 1]} : vector<64x16xf32> to vector<64x12xf32>
    %c1 = arith.constant 1 : index
    %6 = memref.load %arg1[%c1] : memref<5xf32, #tpu.memory_space<smem>>
    %7 = vector.broadcast %6 : f32 to vector<64x12xf32>
    %8 = arith.addf %5, %7 : vector<64x12xf32>
    %9 = arith.maximumf %4, %8 : vector<64x12xf32>
    %10 = vector.extract_strided_slice %0 {offsets = [0, 2], sizes = [64, 12], strides = [1, 1]} : vector<64x16xf32> to vector<64x12xf32>
    %c2 = arith.constant 2 : index
    %11 = memref.load %arg1[%c2] : memref<5xf32, #tpu.memory_space<smem>>
    %12 = vector.broadcast %11 : f32 to vector<64x12xf32>
    %13 = arith.addf %10, %12 : vector<64x12xf32>
    %14 = arith.maximumf %9, %13 : vector<64x12xf32>
    %15 = vector.extract_strided_slice %0 {offsets = [0, 3], sizes = [64, 12], strides = [1, 1]} : vector<64x16xf32> to vector<64x12xf32>
    %c3 = arith.constant 3 : index
    %16 = memref.load %arg1[%c3] : memref<5xf32, #tpu.memory_space<smem>>
    %17 = vector.broadcast %16 : f32 to vector<64x12xf32>
    %18 = arith.addf %15, %17 : vector<64x12xf32>
    %19 = arith.maximumf %14, %18 : vector<64x12xf32>
    %20 = vector.extract_strided_slice %0 {offsets = [0, 4], sizes = [64, 12], strides = [1, 1]} : vector<64x16xf32> to vector<64x12xf32>
    %c4 = arith.constant 4 : index
    %21 = memref.load %arg1[%c4] : memref<5xf32, #tpu.memory_space<smem>>
    %22 = vector.broadcast %21 : f32 to vector<64x12xf32>
    %23 = arith.addf %20, %22 : vector<64x12xf32>
    %24 = arith.maximumf %19, %23 : vector<64x12xf32>
    %c0_2 = arith.constant 0 : index
    %c0_3 = arith.constant 0 : index
    %25 = vector.load %arg3[%c0_2, %c0_3] : memref<64x12xf32, #tpu.memory_space<vmem>>, vector<64x12xf32>
    tpu.vector_store %arg3[%c0_2, %c0_3], %24 {strides = array<i32>} : memref<64x12xf32, #tpu.memory_space<vmem>>, vector<64x12xf32>,
    return
  }
  func.func @transform_0(%arg0: i32) -> i32 {
    %c0_i32 = arith.constant 0 : i32
    %c0_i32_0 = arith.constant 0 : i32
    return %c0_i32 : i32
  }
  func.func @transform_1(%arg0: i32) -> (i32, i32) {
    %c0_i32 = arith.constant 0 : i32
    %c0_i32_0 = arith.constant 0 : i32
    return %arg0, %c0_i32 : i32, i32
  }
  func.func @transform_2(%arg0: i32) -> (i32, i32) {
    %c0_i32 = arith.constant 0 : i32
    %c0_i32_0 = arith.constant 0 : i32
    return %arg0, %c0_i32 : i32, i32
  }
}

</mosaic_0001>

<llo_original>
// kernel: tpu_custom_call.1
$region0: #{tpu_custom_call.1}
  #allocation0 [shape = 'u32[]', space=smem, size = 0x4, offset = 0x4, fixed_abs, tag = 'smem constant byte address 0x4 - core index']
  #allocation1 [shape = 'u32[72,128]{1,0:T(1,128)}', space=vmem, size = 0x9000, scoped, tag = 'internal scratch']
  %s0 = inlined_call_operand.vmem [shape: f32[5], index: 0, kind: input, shape index: {}]
  %s1 = inlined_call_operand.vmem [shape: f32[128,16], index: 1, kind: input, shape index: {}]
  %s2 = inlined_call_operand.vmem [shape: f32[128,12], index: 2, kind: output, shape index: {}]
  %s3 = sld [smem:[#allocation0]]
  $region45: #{tpu_custom_call.1} parent=0
    _
  %s5 = ssub.s32 1, %s3
  %s6 = scalar_select 0, %s5, %s3
  $region1: #{tpu_custom_call.1} parent=0
    #allocation2 [shape = 'u8[512]{0}', space=smem, size = 0x200, scoped, tag = 'input window, operand 0, single buffered']
    #allocation3 [shape = 's32[2]{0}', space=sflag, size = 0x8, scoped, tag = 'scoped memory for tpu_custom_call.1']
    %7 = vsyncpa [#allocation3], 0
    loop: start=0, step=1, limit=4
    $region2: #{tpu_custom_call.1} parent=1 // loop_pre_header
      _
    $region3: #{tpu_custom_call.1} parent=1 // loop_header
      %s9 = sphi 0, %s13
      %p10 = scmp.ge.s32.totalorder %s9, 4
      %s17 = sphi 0, %s17
      %s19 = sphi 0, %s17
      %s20 = sphi 0, %s19
      %s34 = sphi 0, %s20
      %s40 = sphi 0, %s42
      %s43 = sphi 0, %s40
      %s44 = sphi 0, %s43
      %s60 = sphi 0, %s44
      %s66 = sphi 0, %s68
      %s69 = sphi 0, %s66
      %s70 = sphi 0, %s69
      %s86 = sphi 0, %s70
    $region4: #{tpu_custom_call.1} parent=1 // loop_header_branch
      %12 = sbr.rel (%p10) target = $region8
    $region5: #{tpu_custom_call.1} parent=1 // loop_body
      %s14 = ssub.s32 %s9, 1
      %s15 = ssub.s32 %s9, 2
      %s16 = sadd.s32 %s9, 1
      %s18 = sadd.s32 %s17, 1
      %p21 = scmp.eq.s32.totalorder %s9, 1
      %p22 = scmp.ne.s32.totalorder %s17, %s19
      %p23 = scmp.eq.s32.totalorder %s9, 0
      %p24 = por %p22, %p23
      %p25 = scmp.ne.s32.totalorder %s17, %s19
      %p26 = scmp.eq.s32.totalorder %s14, 1
      %p27 = por %p25, %p26
      %p28 = scmp.ne.s32.totalorder %s19, %s20
      %p29 = scmp.eq.s32.totalorder %s14, 0
      %p30 = por %p28, %p29
      %p31 = scmp.ne.s32.totalorder %s19, %s20
      %p32 = scmp.eq.s32.totalorder %s15, 1
      %p33 = por %p31, %p32
      %p35 = scmp.ne.s32.totalorder %s20, %s34
      %p36 = scmp.eq.s32.totalorder %s15, 0
      %p37 = por %p35, %p36
      %s38 = ssub.s32 %s9, %s16
      %p39 = scmp.eq.s32.totalorder %s38, 0
      %s41 = sadd.s32 %s40, 1
      %s42 = scalar_select %p39, %s40, %s41
      %p45 = pneg %p39
      %p46 = scmp.eq.s32.totalorder %s9, 1
      %p47 = por %p45, %p46
      %p48 = scmp.ne.s32.totalorder %s40, %s43
      %p49 = scmp.eq.s32.totalorder %s9, 0
      %p50 = por %p48, %p49
      %p51 = scmp.ne.s32.totalorder %s40, %s43
      %p52 = scmp.eq.s32.totalorder %s14, 1
      %p53 = por %p51, %p52
      %p54 = scmp.ne.s32.totalorder %s43, %s44
      %p55 = scmp.eq.s32.totalorder %s14, 0
      %p56 = por %p54, %p55
      %p57 = scmp.ne.s32.totalorder %s43, %s44
      %p58 = scmp.eq.s32.totalorder %s15, 1
      %p59 = por %p57, %p58
      %p61 = scmp.ne.s32.totalorder %s44, %s60
      %p62 = scmp.eq.s32.totalorder %s15, 0
      %p63 = por %p61, %p62
      %s64 = ssub.s32 %s9, %s16
      %p65 = scmp.eq.s32.totalorder %s64, 0
      %s67 = sadd.s32 %s66, 1
      %s68 = scalar_select %p65, %s66, %s67
      %p71 = pneg %p65
      %p72 = scmp.eq.s32.totalorder %s9, 1
      %p73 = por %p71, %p72
      %p74 = scmp.ne.s32.totalorder %s66, %s69
      %p75 = scmp.eq.s32.totalorder %s9, 0
      %p76 = por %p74, %p75
      %p77 = scmp.ne.s32.totalorder %s66, %s69
      %p78 = scmp.eq.s32.totalorder %s14, 1
      %p79 = por %p77, %p78
      %p80 = scmp.ne.s32.totalorder %s69, %s70
      %p81 = scmp.eq.s32.totalorder %s14, 0
      %p82 = por %p80, %p81
      %p83 = scmp.ne.s32.totalorder %s69, %s70
      %p84 = scmp.eq.s32.totalorder %s15, 1
      %p85 = por %p83, %p84
      %p87 = scmp.ne.s32.totalorder %s70, %s86
      %p88 = scmp.eq.s32.totalorder %s15, 0
      %p89 = por %p87, %p88
      %p90 = scmp.le.s32.totalorder 1, %s9
      %p91 = scmp.lt.s32.totalorder %s9, 3
      %p92 = pnand %p90, %p91
      %p93 = pneg %p92
      // Predicated region
      $region9: #{tpu_custom_call.1} parent=5 // pred_check
        _
      $region10: #{tpu_custom_call.1} parent=5 // pred_check_branch
        %95 = sbr.rel (%p92) target = $region12
      $region11: #{tpu_custom_call.1} parent=5 // pred_region
        %s96 = ssub.s32 %s9, 1
        // Predicated region
        $region13: #{tpu_custom_call.1} parent=11 // pred_check
          %p97 = pneg %p30
        $region14: #{tpu_custom_call.1} parent=11 // pred_check_branch
          %99 = sbr.rel (%p97) target = $region16
        $region15: #{tpu_custom_call.1} parent=11 // pred_region
          %101 = vsyncadd [#allocation3], 0
          %s103 = sshll.u32 %s0, 4
          %s104 = int_to_ptr.vmem [resolvable:$true] %s103
          %106 = dma.vmem_to_smem %s104, 16, [#allocation2], [#allocation3]
        $region16: #{tpu_custom_call.1} parent=11 // pred_fallthru
          _
      $region12: #{tpu_custom_call.1} parent=5 // pred_fallthru
        _
      %p107 = scmp.lt.s32.totalorder %s9, 2
      // Predicated region
      $region17: #{tpu_custom_call.1} parent=5 // pred_check
        %p108 = pneg %p107
      $region18: #{tpu_custom_call.1} parent=5 // pred_check_branch
        %110 = sbr.rel (%p108) target = $region20
      $region19: #{tpu_custom_call.1} parent=5 // pred_region
        // Predicated region
        $region21: #{tpu_custom_call.1} parent=19 // pred_check
          %p111 = pneg %p50
        $region22: #{tpu_custom_call.1} parent=19 // pred_check_branch
          %113 = sbr.rel (%p111) target = $region24
        $region23: #{tpu_custom_call.1} parent=19 // pred_region
          %s114 = smul.u32 8, %s9
          %p115 = scmp.lt.s32.totalorder %s114, 15
          %s116 = scalar_select %p115, %s114, 15
          %s117 = smul.addr %s116, 8
          %s118 = scalar_lea.vmem %s1, %s117
          %s119 = smul.u32 8, %s9
        $region24: #{tpu_custom_call.1} parent=19 // pred_fallthru
          _
      $region20: #{tpu_custom_call.1} parent=5 // pred_fallthru
        _
      %p120 = scmp.le.s32.totalorder 1, %s9
      %p121 = scmp.lt.s32.totalorder %s9, 3
      %p122 = pnand %p120, %p121
      %p123 = pneg %p122
      // Predicated region
      $region25: #{tpu_custom_call.1} parent=5 // pred_check
        _
      $region26: #{tpu_custom_call.1} parent=5 // pred_check_branch
        %125 = sbr.rel (%p122) target = $region28
      $region27: #{tpu_custom_call.1} parent=5 // pred_region
        %s126 = ssub.s32 %s9, 1
        // Predicated region
        $region29: #{tpu_custom_call.1} parent=27 // pred_check
          %p127 = pneg %p30
        $region30: #{tpu_custom_call.1} parent=27 // pred_check_branch
          %129 = sbr.rel (%p127) target = $region32
        $region31: #{tpu_custom_call.1} parent=27 // pred_region
          %131 = dma.done [#allocation3], 16
        $region32: #{tpu_custom_call.1} parent=27 // pred_fallthru
          _
        %132 = sfence
        %p133 = pneg %p30
        %p134 = pneg %p27
        %s135 = smul.u32 8, %s14
        %p136 = scmp.lt.s32.totalorder %s135, 15
        %s137 = scalar_select %p136, %s135, 15
        %s138 = smul.addr %s137, 8
        %s139 = scalar_lea.vmem %s1, %s138
        %p140 = pneg %p56
        %p141 = pneg %p53
        %p142 = pneg %p82
        %p143 = pneg %p79
        %s144 = smul.u32 8, %s14
        %p145 = scmp.lt.s32.totalorder %s144, 15
        %s146 = scalar_select %p145, %s144, 15
        %s147 = smul.addr %s146, 8
        %s148 = scalar_lea.vmem %s2, %s147
        %s149 = smul.u32 8, %s14
        %p150 = scmp.lt.s32.totalorder %s149, 15
        %s151 = scalar_select %p150, %s149, 15
        %s152 = smul.addr %s151, 8
        %s153 = scalar_lea.vmem %s1, %s152
        %s154 = smul.u32 8, %s14
        %s155 = smul.u32 8, %s14
        %p156 = scmp.lt.s32.totalorder %s155, 15
        %s157 = scalar_select %p156, %s155, 15
        %s158 = smul.addr %s157, 8
        %s159 = scalar_lea.vmem %s2, %s158
        %s160 = smul.u32 8, %s14
        %v161 = vld [vmem:[%s153] sm:$0xff]
        %v162 = vld [vmem:[%s153 + $0x8] sm:$0xff]
        %v163 = vld [vmem:[%s153 + $0x10] sm:$0xff]
        %v164 = vld [vmem:[%s153 + $0x18] sm:$0xff]
        %v165 = vld [vmem:[%s153 + $0x20] sm:$0xff]
        %v166 = vld [vmem:[%s153 + $0x28] sm:$0xff]
        %v167 = vld [vmem:[%s153 + $0x30] sm:$0xff]
        %v168 = vld [vmem:[%s153 + $0x38] sm:$0xff]
        %s169 = sld [smem:[#allocation2]]
        %v170 = vstv %s169
        %v171 = vadd.f32 %v161, %v170
        %v172 = vadd.f32 %v162, %v170
        %v173 = vadd.f32 %v163, %v170
        %v174 = vadd.f32 %v164, %v170
        %v175 = vadd.f32 %v165, %v170
        %v176 = vadd.f32 %v166, %v170
        %v177 = vadd.f32 %v167, %v170
        %v178 = vadd.f32 %v168, %v170
        %s179 = sld [smem:[#allocation2 + $0x1]]
        %v180 = vstv %s179
        %v181 = vadd.f32 %v161, %v180
        %v182 = vadd.f32 %v162, %v180
        %v183 = vadd.f32 %v163, %v180
        %v184 = vadd.f32 %v164, %v180
        %v185 = vadd.f32 %v165, %v180
        %v186 = vadd.f32 %v166, %v180
        %v187 = vadd.f32 %v167, %v180
        %v188 = vadd.f32 %v168, %v180
        %197 = vrot.lane.b32.xlu0 %v181, 127
        %v198 = vpop.permute.xlu0 %197
        %199 = vrot.lane.b32.xlu0 %v182, 127
        %v200 = vpop.permute.xlu0 %199
        %201 = vrot.lane.b32.xlu0 %v183, 127
        %v202 = vpop.permute.xlu0 %201
        %203 = vrot.lane.b32.xlu0 %v184, 127
        %v204 = vpop.permute.xlu0 %203
        %205 = vrot.lane.b32.xlu0 %v185, 127
        %v206 = vpop.permute.xlu0 %205
        %207 = vrot.lane.b32.xlu0 %v186, 127
        %v208 = vpop.permute.xlu0 %207
        %209 = vrot.lane.b32.xlu0 %v187, 127
        %v210 = vpop.permute.xlu0 %209
        %211 = vrot.lane.b32.xlu0 %v188, 127
        %v212 = vpop.permute.xlu0 %211
        %v221 = vmax.f32 %v171, %v198
        %v222 = vmax.f32 %v172, %v200
        %v223 = vmax.f32 %v173, %v202
        %v224 = vmax.f32 %v174, %v204
        %v225 = vmax.f32 %v175, %v206
        %v226 = vmax.f32 %v176, %v208
        %v227 = vmax.f32 %v177, %v210
        %v228 = vmax.f32 %v178, %v212
        %s229 = sld [smem:[#allocation2 + $0x2]]
        %v230 = vstv %s229
        %v231 = vadd.f32 %v161, %v230
        %v232 = vadd.f32 %v162, %v230
        %v233 = vadd.f32 %v163, %v230
        %v234 = vadd.f32 %v164, %v230
        %v235 = vadd.f32 %v165, %v230
        %v236 = vadd.f32 %v166, %v230
        %v237 = vadd.f32 %v167, %v230
        %v238 = vadd.f32 %v168, %v230
        %247 = vrot.lane.b32.xlu0 %v231, 126
        %v248 = vpop.permute.xlu0 %247
        %249 = vrot.lane.b32.xlu0 %v232, 126
        %v250 = vpop.permute.xlu0 %249
        %251 = vrot.lane.b32.xlu0 %v233, 126
        %v252 = vpop.permute.xlu0 %251
        %253 = vrot.lane.b32.xlu0 %v234, 126
        %v254 = vpop.permute.xlu0 %253
        %255 = vrot.lane.b32.xlu0 %v235, 126
        %v256 = vpop.permute.xlu0 %255
        %257 = vrot.lane.b32.xlu0 %v236, 126
        %v258 = vpop.permute.xlu0 %257
        %259 = vrot.lane.b32.xlu0 %v237, 126
        %v260 = vpop.permute.xlu0 %259
        %261 = vrot.lane.b32.xlu0 %v238, 126
        %v262 = vpop.permute.xlu0 %261
        %v271 = vmax.f32 %v221, %v248
        %v272 = vmax.f32 %v222, %v250
        %v273 = vmax.f32 %v223, %v252
        %v274 = vmax.f32 %v224, %v254
        %v275 = vmax.f32 %v225, %v256
        %v276 = vmax.f32 %v226, %v258
        %v277 = vmax.f32 %v227, %v260
        %v278 = vmax.f32 %v228, %v262
        %s279 = sld [smem:[#allocation2 + $0x3]]
        %v280 = vstv %s279
        %v281 = vadd.f32 %v161, %v280
        %v282 = vadd.f32 %v162, %v280
        %v283 = vadd.f32 %v163, %v280
        %v284 = vadd.f32 %v164, %v280
        %v285 = vadd.f32 %v165, %v280
        %v286 = vadd.f32 %v166, %v280
        %v287 = vadd.f32 %v167, %v280
        %v288 = vadd.f32 %v168, %v280
        %297 = vrot.lane.b32.xlu0 %v281, 125
        %v298 = vpop.permute.xlu0 %297
        %299 = vrot.lane.b32.xlu0 %v282, 125
        %v300 = vpop.permute.xlu0 %299
        %301 = vrot.lane.b32.xlu0 %v283, 125
        %v302 = vpop.permute.xlu0 %301
        %303 = vrot.lane.b32.xlu0 %v284, 125
        %v304 = vpop.permute.xlu0 %303
        %305 = vrot.lane.b32.xlu0 %v285, 125
        %v306 = vpop.permute.xlu0 %305
        %307 = vrot.lane.b32.xlu0 %v286, 125
        %v308 = vpop.permute.xlu0 %307
        %309 = vrot.lane.b32.xlu0 %v287, 125
        %v310 = vpop.permute.xlu0 %309
        %311 = vrot.lane.b32.xlu0 %v288, 125
        %v312 = vpop.permute.xlu0 %311
        %v321 = vmax.f32 %v271, %v298
        %v322 = vmax.f32 %v272, %v300
        %v323 = vmax.f32 %v273, %v302
        %v324 = vmax.f32 %v274, %v304
        %v325 = vmax.f32 %v275, %v306
        %v326 = vmax.f32 %v276, %v308
        %v327 = vmax.f32 %v277, %v310
        %v328 = vmax.f32 %v278, %v312
        %s329 = sld [smem:[#allocation2 + $0x4]]
        %v330 = vstv %s329
        %v331 = vadd.f32 %v161, %v330
        %v332 = vadd.f32 %v162, %v330
        %v333 = vadd.f32 %v163, %v330
        %v334 = vadd.f32 %v164, %v330
        %v335 = vadd.f32 %v165, %v330
        %v336 = vadd.f32 %v166, %v330
        %v337 = vadd.f32 %v167, %v330
        %v338 = vadd.f32 %v168, %v330
        %347 = vrot.lane.b32.xlu0 %v331, 124
        %v348 = vpop.permute.xlu0 %347
        %349 = vrot.lane.b32.xlu0 %v332, 124
        %v350 = vpop.permute.xlu0 %349
        %351 = vrot.lane.b32.xlu0 %v333, 124
        %v352 = vpop.permute.xlu0 %351
        %353 = vrot.lane.b32.xlu0 %v334, 124
        %v354 = vpop.permute.xlu0 %353
        %355 = vrot.lane.b32.xlu0 %v335, 124
        %v356 = vpop.permute.xlu0 %355
        %357 = vrot.lane.b32.xlu0 %v336, 124
        %v358 = vpop.permute.xlu0 %357
        %359 = vrot.lane.b32.xlu0 %v337, 124
        %v360 = vpop.permute.xlu0 %359
        %361 = vrot.lane.b32.xlu0 %v338, 124
        %v362 = vpop.permute.xlu0 %361
        %v371 = vmax.f32 %v321, %v348
        %v372 = vmax.f32 %v322, %v350
        %v373 = vmax.f32 %v323, %v352
        %v374 = vmax.f32 %v324, %v354
        %v375 = vmax.f32 %v325, %v356
        %v376 = vmax.f32 %v326, %v358
        %v377 = vmax.f32 %v327, %v360
        %v378 = vmax.f32 %v328, %v362
        %vm379 = vcmask 97280
        %380 = vst.msk [vmem:[%s159] sm:$0xff] %vm379, %v371
        %381 = vst.msk [vmem:[%s159 + $0x8] sm:$0xff] %vm379, %v372
        %382 = vst.msk [vmem:[%s159 + $0x10] sm:$0xff] %vm379, %v373
        %383 = vst.msk [vmem:[%s159 + $0x18] sm:$0xff] %vm379, %v374
        %384 = vst.msk [vmem:[%s159 + $0x20] sm:$0xff] %vm379, %v375
        %385 = vst.msk [vmem:[%s159 + $0x28] sm:$0xff] %vm379, %v376
        %386 = vst.msk [vmem:[%s159 + $0x30] sm:$0xff] %vm379, %v377
        %387 = vst.msk [vmem:[%s159 + $0x38] sm:$0xff] %vm379, %v378
        %s388 = smul.u32 8, %s14
        %p389 = scmp.lt.s32.totalorder %s388, 15
        %s390 = scalar_select %p389, %s388, 15
        %s391 = smul.addr %s390, 8
        %s392 = scalar_lea.vmem %s2, %s391
        // Predicated region
        $region33: #{tpu_custom_call.1} parent=27 // pred_check
          %p393 = pneg %p79
        $region34: #{tpu_custom_call.1} parent=27 // pred_check_branch
          %395 = sbr.rel (%p393) target = $region36
        $region35: #{tpu_custom_call.1} parent=27 // pred_region
          %s396 = smul.u32 8, %s14
        $region36: #{tpu_custom_call.1} parent=27 // pred_fallthru
          _
      $region28: #{tpu_custom_call.1} parent=5 // pred_fallthru
        _
      %p397 = scmp.le.s32.totalorder 2, %s9
      // Predicated region
      $region37: #{tpu_custom_call.1} parent=5 // pred_check
        %p398 = pneg %p397
      $region38: #{tpu_custom_call.1} parent=5 // pred_check_branch
        %400 = sbr.rel (%p398) target = $region40
      $region39: #{tpu_custom_call.1} parent=5 // pred_region
        %s401 = ssub.s32 %s9, 2
        // Predicated region
        $region41: #{tpu_custom_call.1} parent=39 // pred_check
          %p402 = pneg %p85
        $region42: #{tpu_custom_call.1} parent=39 // pred_check_branch
          %404 = sbr.rel (%p402) target = $region44
        $region43: #{tpu_custom_call.1} parent=39 // pred_region
          %s405 = smul.u32 8, %s15
          %p406 = scmp.lt.s32.totalorder %s405, 15
          %s407 = scalar_select %p406, %s405, 15
          %s408 = smul.addr %s407, 8
          %s409 = scalar_lea.vmem %s2, %s408
        $region44: #{tpu_custom_call.1} parent=39 // pred_fallthru
          _
      $region40: #{tpu_custom_call.1} parent=5 // pred_fallthru
        _
    $region6: #{tpu_custom_call.1} parent=1 // loop_footer
      %s13 = sadd.s32 1, %s9
    $region7: #{tpu_custom_call.1} parent=1 // loop_footer_branch
      %8 = sbr.rel target = $region3
    $region8: #{tpu_custom_call.1} parent=1 // loop_exit
      _
    %410 = vsyncpa [#allocation3], 1
    %s411 = scalar_lea.sflag [#allocation3], 1
    %412 = vsyncpa %s411, 1

</llo_original>
